<compile_context>
chip_gen: v5e
topology: v5e:2x2
jax: 0.10.0
libtpu: 0.0.40
codegen_flags: <defaults>
</compile_context>

<pallas_src>
import jax
import jax.numpy as jnp
from jax import lax
from jax.experimental import pallas as pl
from jax.experimental.pallas import tpu as pltpu

LANES = 128
SUBLANES = 8
CHUNK_ROWS = 64            # 8 f32 vregs of `pred` per inner-loop iteration
MAX_TILE_ROWS = 8192       # 4 MiB of f32 pred rows per buffer
NUM_CORE_SPLITS = 2        # v7x has 2 TensorCores; harmless serial loop on v5e/v6e
MIN_STEPS_PER_SPLIT = 4    # don't halve pipeline depth for small inputs


def _round_up(a, b):
    return (a + b - 1) // b * b


def _vmem_capacity_bytes():
    try:
        cap = getattr(pltpu.get_tpu_info(), "vmem_capacity_bytes", None)
        if cap:
            return int(cap)
    except Exception:
        pass
    return 64 << 20        # conservative fallback (v7x per-TC VMEM)


def _make_kernel(tile_rows, steps, num_tiles, valid_rows, needs_mask):
    n_chunks = tile_rows // CHUNK_ROWS
    unroll = 2 if (n_chunks >= 2 and n_chunks % 2 == 0) else 1

    def tile_partial_sums(x_ref, t_ref, row0):
        """Partial sums over one tile: (x*t, x+t, clamp(log(.),-100)), each (8,128).

        row0 is None on the fully-in-bounds fast path.  Otherwise it is this
        tile's global starting row and rows >= valid_rows are masked out (they
        hold OOB garbage of a partial last block, or duplicated data of a
        phantom trailing block)."""

        def chunk_body(c, carry):
            inter_a, denom_a, log_a = carry
            r = pl.multiple_of(c * CHUNK_ROWS, CHUNK_ROWS)
            x = x_ref[pl.ds(r, CHUNK_ROWS), :].astype(jnp.float32)
            t = t_ref[pl.ds(r, CHUNK_ROWS), :]
            # Binary-target assumption: one compare replaces the f32 cast of t.
            t_mask = t > 0
            if row0 is not None:
                gr = row0 + r + lax.broadcasted_iota(jnp.int32, (CHUNK_ROWS, 1), 0)
                valid = gr < valid_rows
                x = jnp.where(valid, x, 0.0)          # kills OOB garbage / NaNs
                t_mask = jnp.logical_and(t_mask, valid)
            # ONE transcendental per element: t==1 -> log(x), t==0 -> log(1-x).
            # NOTE: the -100 clamp is applied to the log itself (exactly as in
            # PyTorch's binary_cross_entropy), BEFORE any multiply by t/(1-t);
            # that keeps x==0 / x==1 and zero-padded tails finite (no 0 * -inf).
            log_term = jnp.maximum(jnp.log(jnp.where(t_mask, x, 1.0 - x)), -100.0)
            inter = jnp.where(t_mask, x, 0.0)          # x * t
            denom = x + jnp.where(t_mask, 1.0, 0.0)    # x + t (combined dice denom)

            def vsum(v):   # (CHUNK_ROWS,128) -> (8,128): vreg-aligned VALU adds only
                return jnp.sum(v.reshape(CHUNK_ROWS // SUBLANES, SUBLANES, LANES),
                               axis=0)

            return (inter_a + vsum(inter),
                    denom_a + vsum(denom),
                    log_a + vsum(log_term))

        zero = jnp.zeros((SUBLANES, LANES), jnp.float32)
        return lax.fori_loop(0, n_chunks, chunk_body, (zero, zero, zero),
                             unroll=unroll)

    def kernel(x_ref, t_ref, acc_ref):
        # grid = (core_split, step); the (3,8,128) accumulator block depends
        # only on core_split, so it stays resident in VMEM across the inner
        # "arbitrary" step axis.
        @pl.when(pl.program_id(1) == 0)
        def _():
            acc_ref[...] = jnp.zeros_like(acc_ref)

        tile_id = pl.program_id(0) * steps + pl.program_id(1)

        if not needs_mask:
            acc_ref[...] += jnp.stack(tile_partial_sums(x_ref, t_ref, None), axis=0)
        else:
            # Only the last real tile (possibly partial) and phantom trailing
            # tiles pay for the row mask; every other step takes the fast path.
            is_tail = tile_id >= num_tiles - 1

            @pl.when(jnp.logical_not(is_tail))
            def _fast():
                acc_ref[...] += jnp.stack(
                    tile_partial_sums(x_ref, t_ref, None), axis=0)

            @pl.when(is_tail)
            def _masked():
                acc_ref[...] += jnp.stack(
                    tile_partial_sums(x_ref, t_ref, tile_id * tile_rows), axis=0)

    return kernel


def combo_pallas(pred, true, smooth=1.0, max_tile_rows=None):
    CE_RATIO = 0.5
    n = pred.size

    # Row-major flatten (same element order as torch .reshape(-1)); reshapes of
    # contiguous arrays are free (no HBM copy).  Targets stay in native dtype.
    x = pred.reshape(-1)
    t = true.reshape(-1)
    if t.dtype == jnp.bool_:
        t = t.astype(jnp.int8)   # cheap 1-byte pass; bool refs are awkward on TPU

    # Pad only the <128-element remainder needed for the (rows, 128) reshape.
    # Padded elements are x=0, t=0 and contribute exactly 0 to every partial
    # sum (log(1-0)=0 under the -100 clamp), so no mask is needed for them.
    rem = (-n) % LANES
    if rem:
        x = jnp.pad(x, (0, rem))
        t = jnp.pad(t, (0, rem))
    rows = (n + rem) // LANES

    # ---- tile sizing: biggest tile whose double-buffered in-flight bytes fit
    # in ~1/4 of this generation's VMEM (v5e/v6e 128 MiB, v7x 64 MiB per TC).
    x_item = x.dtype.itemsize
    t_item = t.dtype.itemsize
    bytes_per_row = LANES * (x_item + t_item)
    vmem_cap = _vmem_capacity_bytes()
    tile_rows = (vmem_cap // 4) // (2 * bytes_per_row)
    cap_rows = min(MAX_TILE_ROWS, max_tile_rows) if max_tile_rows else MAX_TILE_ROWS
    tile_rows = max(CHUNK_ROWS, min(cap_rows, tile_rows // CHUNK_ROWS * CHUNK_ROWS))

    if rows <= tile_rows:
        # Small input: one tile covering everything; pad rows to a CHUNK
        # multiple (cheap at this size; padded zeros contribute 0).
        tile_rows = _round_up(rows, CHUNK_ROWS)
        pad_rows = tile_rows - rows
        if pad_rows:
            x = jnp.pad(x, (0, pad_rows * LANES))
            t = jnp.pad(t, (0, pad_rows * LANES))
        rows = tile_rows
        num_tiles, splits, steps, needs_mask = 1, 1, 1, False
    else:
        num_tiles = pl.cdiv(rows, tile_rows)
        splits = (NUM_CORE_SPLITS
                  if num_tiles >= NUM_CORE_SPLITS * MIN_STEPS_PER_SPLIT else 1)
        steps = pl.cdiv(num_tiles, splits)
        needs_mask = (splits * steps != num_tiles) or (rows % tile_rows != 0)

    x2 = x.reshape(-1, LANES)
    t2 = t.reshape(-1, LANES)

    def in_index_map(c, i):
        b = c * steps + i
        # Phantom trailing blocks (when splits*steps > num_tiles) re-read the
        # last real tile; their contribution is masked to zero in-kernel.
        return (jnp.minimum(b, num_tiles - 1), 0)

    buffers_bytes = 2 * tile_rows * bytes_per_row      # double-buffered inputs
    vmem_limit = int(min(vmem_cap, max(32 << 20, buffers_bytes + (8 << 20))))

    kernel = _make_kernel(tile_rows, steps, num_tiles, rows, needs_mask)

    acc = pl.pallas_call(
        kernel,
        out_shape=jax.ShapeDtypeStruct((splits * 3, SUBLANES, LANES), jnp.float32),
        grid=(splits, steps),
        in_specs=[
            pl.BlockSpec((tile_rows, LANES), in_index_map),
            pl.BlockSpec((tile_rows, LANES), in_index_map),
        ],
        out_specs=pl.BlockSpec((3, SUBLANES, LANES), lambda c, i: (c, 0, 0)),
        compiler_params=pltpu.CompilerParams(
            dimension_semantics=("parallel", "arbitrary"),
            vmem_limit_bytes=vmem_limit),
    )(x2, t2)

    sums = acc.reshape(splits, 3, SUBLANES, LANES).sum(axis=(0, 2, 3))
    intersection, denom, log_sum = sums[0], sums[1], sums[2]

    dice = (2.0 * intersection + smooth) / (denom + smooth)
    bce_mean = -log_sum / n        # negate folded here; reduction='mean' over n
    weighted_ce = bce_mean         # scalar .mean(-1) is identity
    return CE_RATIO * weighted_ce + (1.0 - CE_RATIO) * (1.0 - dice)


class ComboLoss:
    """JAX/Pallas counterpart of the PyTorch ComboLoss module."""

    def __init__(self, weight):
        self.weight = weight

    def __call__(self, pred, true):
        if len(self.weight) != pred.shape[1]:
            raise ValueError("shape is not mapping")
        # NOTE: in the reference module the weighted per-(batch, class) loop is
        # discarded (overwritten by `loss = self.combo(pred, true)`), so the
        # forward pass is exactly combo over the full tensors.
        return combo_pallas(pred, true)


def _reference(pred, true, smooth=1.0):
    """Pure-JAX mirror of ComboLoss.forward (== ComboLoss.combo(pred, true))."""
    CE_RATIO = 0.5
    x = pred.reshape(-1).astype(jnp.float32)
    t = true.reshape(-1).astype(jnp.float32)
    intersection = (x * t).sum()
    dice = (2.0 * intersection + smooth) / (x.sum() + t.sum() + smooth)
    log_x = jnp.maximum(jnp.log(x), -100.0)          # PyTorch BCE log clamp
    log_1mx = jnp.maximum(jnp.log(1.0 - x), -100.0)
    bce = jnp.mean(-(t * log_x + (1.0 - t) * log_1mx))
    return CE_RATIO * bce + (1.0 - CE_RATIO) * (1.0 - dice)


if __name__ == "__main__":
    key = jax.random.PRNGKey(0)
    k1, k2, k3, k4 = jax.random.split(key, 4)

    # Test A: the module's nominal small shape (NCHW, 4 classes) -> single tile.
    pred_a = jax.nn.sigmoid(jax.random.normal(k1, (2, 4, 16, 16), dtype=jnp.float32))
    true_a = (jax.random.uniform(k2, (2, 4, 16, 16)) > 0.5).astype(jnp.float32)
    loss_fn = ComboLoss(weight=[1.0, 1.0, 1.0, 1.0])
    out_a = jax.block_until_ready(loss_fn(pred_a, true_a))
    ref_a = _reference(pred_a, true_a)
    assert jnp.allclose(out_a, ref_a, rtol=1e-5, atol=1e-6), (out_a, ref_a)

    # Test B: exercise the multi-tile / 2-split / ragged-tail + phantom-tile
    # path at small size by capping the tile at 64 rows (520 rows of data).
    pred_b = jax.nn.sigmoid(jax.random.normal(k3, (4, 4, 65, 64), dtype=jnp.float32))
    true_b = (jax.random.uniform(k4, (4, 4, 65, 64)) > 0.5).astype(jnp.float32)
    out_b = jax.block_until_ready(combo_pallas(pred_b, true_b, max_tile_rows=64))
    ref_b = _reference(pred_b, true_b)
    assert jnp.allclose(out_b, ref_b, rtol=1e-5, atol=1e-6), (out_b, ref_b)

    print("KERNEL_OK")
</pallas_src>

<mosaic_0001>
module attributes {stable_mosaic.version = 11 : i64} {
  func.func @kernel(%arg0: i32, %arg1: i32, %arg2: memref<64x128xf32, #tpu.memory_space<vmem>>, %arg3: memref<64x128xf32, #tpu.memory_space<vmem>>, %arg4: memref<3x8x128xf32, #tpu.memory_space<vmem>>) attributes {dimension_semantics = [#tpu.dimension_semantics<parallel>, #tpu.dimension_semantics<arbitrary>], iteration_bounds = array<i64: 1, 1>, scalar_prefetch = 0 : i64, scratch_operands = 0 : i64, tpu.core_type = #tpu.core_type<tc>, window_params = [{transform_indices = @transform_0, window_bounds = array<i64: 64, 128>}, {transform_indices = @transform_1, window_bounds = array<i64: 64, 128>}, {transform_indices = @transform_2, window_bounds = array<i64: 3, 8, 128>}]} {
    %c0_i32 = arith.constant 0 : i32
    %0 = arith.cmpi eq, %arg1, %c0_i32 : i32
    %1 = arith.extui %0 : i1 to i32
    %c0_i32_0 = arith.constant 0 : i32
    %2 = arith.cmpi ne, %1, %c0_i32_0 : i32
    scf.if %2 {
      %cst_18 = arith.constant 0.000000e+00 : f32
      %40 = vector.broadcast %cst_18 : f32 to vector<3x8x128xf32>
      %c0_19 = arith.constant 0 : index
      %c0_20 = arith.constant 0 : index
      %c0_21 = arith.constant 0 : index
      %41 = vector.load %arg4[%c0_19, %c0_20, %c0_21] : memref<3x8x128xf32, #tpu.memory_space<vmem>>, vector<3x8x128xf32>
      tpu.vector_store %arg4[%c0_19, %c0_20, %c0_21], %40 {strides = array<i32>} : memref<3x8x128xf32, #tpu.memory_space<vmem>>, vector<3x8x128xf32>,
    } else {
    }
    %c0 = arith.constant 0 : index
    %c0_1 = arith.constant 0 : index
    %c0_2 = arith.constant 0 : index
    %3 = vector.load %arg4[%c0, %c0_1, %c0_2] : memref<3x8x128xf32, #tpu.memory_space<vmem>>, vector<3x8x128xf32>
    %cst = arith.constant 0.000000e+00 : f32
    %4 = vector.broadcast %cst : f32 to vector<8x128xf32>
    %c0_i32_3 = arith.constant 0 : i32
    %c64_i32 = arith.constant 64 : i32
    %5 = arith.muli %c0_i32_3, %c64_i32 : i32
    %6 = tpu.assume_multiple %5, 64 : i32
    %7 = arith.index_cast %6 : i32 to index
    %c0_4 = arith.constant 0 : index
    %8 = vector.load %arg2[%7, %c0_4] : memref<64x128xf32, #tpu.memory_space<vmem>>, vector<64x128xf32>
    %9 = arith.index_cast %6 : i32 to index
    %c0_5 = arith.constant 0 : index
    %10 = vector.load %arg3[%9, %c0_5] : memref<64x128xf32, #tpu.memory_space<vmem>>, vector<64x128xf32>
    %cst_6 = arith.constant 0.000000e+00 : f32
    %11 = vector.broadcast %cst_6 : f32 to vector<64x128xf32>
    %12 = arith.cmpf ogt, %10, %11 : vector<64x128xf32>
    %cst_7 = arith.constant 1.000000e+00 : f32
    %13 = vector.broadcast %cst_7 : f32 to vector<64x128xf32>
    %14 = arith.subf %13, %8 : vector<64x128xf32>
    %15 = arith.select %12, %8, %14 : vector<64x128xi1>, vector<64x128xf32>
    %16 = math.log %15 : vector<64x128xf32>
    %cst_8 = arith.constant -1.000000e+02 : f32
    %17 = vector.broadcast %cst_8 : f32 to vector<64x128xf32>
    %18 = arith.maximumf %16, %17 : vector<64x128xf32>
    %cst_9 = arith.constant 0.000000e+00 : f32
    %19 = vector.broadcast %cst_9 : f32 to vector<64x128xf32>
    %20 = arith.select %12, %8, %19 : vector<64x128xi1>, vector<64x128xf32>
    %cst_10 = arith.constant 1.000000e+00 : f32
    %cst_11 = arith.constant 0.000000e+00 : f32
    %21 = vector.broadcast %cst_10 : f32 to vector<64x128xf32>
    %22 = vector.broadcast %cst_11 : f32 to vector<64x128xf32>
    %23 = arith.select %12, %21, %22 : vector<64x128xi1>, vector<64x128xf32>
    %24 = arith.addf %8, %23 : vector<64x128xf32>
    %25 = vector.shape_cast %20 : vector<64x128xf32> to vector<8x8x128xf32>
    %cst_12 = arith.constant dense<0.000000e+00> : vector<8x128xf32>
    %26 = vector.multi_reduction <add>, %25, %cst_12 [0] : vector<8x8x128xf32> to vector<8x128xf32>
    %27 = arith.addf %4, %26 : vector<8x128xf32>
    %28 = vector.shape_cast %24 : vector<64x128xf32> to vector<8x8x128xf32>
    %cst_13 = arith.constant dense<0.000000e+00> : vector<8x128xf32>
    %29 = vector.multi_reduction <add>, %28, %cst_13 [0] : vector<8x8x128xf32> to vector<8x128xf32>
    %30 = arith.addf %4, %29 : vector<8x128xf32>
    %31 = vector.shape_cast %18 : vector<64x128xf32> to vector<8x8x128xf32>
    %cst_14 = arith.constant dense<0.000000e+00> : vector<8x128xf32>
    %32 = vector.multi_reduction <add>, %31, %cst_14 [0] : vector<8x8x128xf32> to vector<8x128xf32>
    %33 = arith.addf %4, %32 : vector<8x128xf32>
    %c1_i32 = arith.constant 1 : i32
    %34 = vector.shape_cast %27 : vector<8x128xf32> to vector<1x8x128xf32>
    %35 = vector.shape_cast %30 : vector<8x128xf32> to vector<1x8x128xf32>
    %36 = vector.shape_cast %33 : vector<8x128xf32> to vector<1x8x128xf32>
    %37 = tpu.concatenate %34, %35, %36 in 0 : vector<1x8x128xf32>, vector<1x8x128xf32>, vector<1x8x128xf32> -> vector<3x8x128xf32>
    %38 = arith.addf %3, %37 : vector<3x8x128xf32>
    %c0_15 = arith.constant 0 : index
    %c0_16 = arith.constant 0 : index
    %c0_17 = arith.constant 0 : index
    %39 = vector.load %arg4[%c0_15, %c0_16, %c0_17] : memref<3x8x128xf32, #tpu.memory_space<vmem>>, vector<3x8x128xf32>
    tpu.vector_store %arg4[%c0_15, %c0_16, %c0_17], %38 {strides = array<i32>} : memref<3x8x128xf32, #tpu.memory_space<vmem>>, vector<3x8x128xf32>,
    return
  }
  func.func @transform_0(%arg0: i32, %arg1: i32) -> (i32, i32) {
    %c1_i32 = arith.constant 1 : i32
    %0 = arith.muli %arg0, %c1_i32 : i32
    %1 = arith.addi %0, %arg1 : i32
    %c0_i32 = arith.constant 0 : i32
    %2 = arith.minsi %1, %c0_i32 : i32
    %c0_i32_0 = arith.constant 0 : i32
    %c0_i32_1 = arith.constant 0 : i32
    return %2, %c0_i32_0 : i32, i32
  }
  func.func @transform_1(%arg0: i32, %arg1: i32) -> (i32, i32) {
    %c1_i32 = arith.constant 1 : i32
    %0 = arith.muli %arg0, %c1_i32 : i32
    %1 = arith.addi %0, %arg1 : i32
    %c0_i32 = arith.constant 0 : i32
    %2 = arith.minsi %1, %c0_i32 : i32
    %c0_i32_0 = arith.constant 0 : i32
    %c0_i32_1 = arith.constant 0 : i32
    return %2, %c0_i32_0 : i32, i32
  }
  func.func @transform_2(%arg0: i32, %arg1: i32) -> (i32, i32, i32) {
    %c0_i32 = arith.constant 0 : i32
    %c0_i32_0 = arith.constant 0 : i32
    %c0_i32_1 = arith.constant 0 : i32
    return %arg0, %c0_i32, %c0_i32_0 : i32, i32, i32
  }
}

</mosaic_0001>

<llo_original>
// kernel: tpu_custom_call.1
$region0: #{tpu_custom_call.1}
  #allocation0 [shape = 'u32[]', space=smem, size = 0x4, offset = 0x4, fixed_abs, tag = 'smem constant byte address 0x4 - core index']
  #allocation1 [shape = 'u32[72,128]{1,0:T(1,128)}', space=vmem, size = 0x9000, scoped, tag = 'internal scratch']
  %s0 = inlined_call_operand.hbm [shape: f32[64,128], index: 0, kind: input, shape index: {}]
  %s1 = inlined_call_operand.hbm [shape: f32[64,128], index: 1, kind: input, shape index: {}]
  %s2 = inlined_call_operand.hbm [shape: f32[3,8,128], index: 2, kind: output, shape index: {}]
  %s3 = sld [smem:[#allocation0]]
  $region30: #{tpu_custom_call.1} parent=0
    _
  %s5 = ssub.s32 1, %s3
  %s6 = scalar_select 0, %s5, %s3
  $region1: #{tpu_custom_call.1} parent=0
    #allocation2 [shape = 'u8[32768]{0}', space=vmem, size = 0x8000, scoped, tag = 'input window, operand 0, single buffered']
    #allocation3 [shape = 's32[1]{0}', space=sflag, size = 0x4, scoped, tag = 'scoped memory for tpu_custom_call.1']
    #allocation4 [shape = 's32[1]{0}', space=sflag, size = 0x4, scoped, tag = 'scoped memory for tpu_custom_call.1']
    #allocation5 [shape = 'u8[32768]{0}', space=vmem, size = 0x8000, scoped, tag = 'input window, operand 1, single buffered']
    #allocation6 [shape = 's32[1]{0}', space=sflag, size = 0x4, scoped, tag = 'scoped memory for tpu_custom_call.1']
    #allocation7 [shape = 'u8[12288]{0}', space=vmem, size = 0x3000, scoped, tag = 'output window, operand 0, single buffered']
    %7 = vsyncpa [#allocation3], 0
    %8 = vsyncpa [#allocation6], 0
    %9 = vsyncpa [#allocation4], 0
    // Predicated region
    $region2: #{tpu_custom_call.1} parent=1 // pred_check
      _
    $region3: #{tpu_custom_call.1} parent=1 // pred_check_branch
      %11 = sbr.rel (0) target = $region5
    $region4: #{tpu_custom_call.1} parent=1 // pred_region
      %s12 = sadd.s32 0, 0
      %p13 = scmp.lt.s32.totalorder %s12, 0
      %s14 = scalar_select %p13, %s12, 0
      %s15 = smul.u32 8, %s14
      %17 = vsyncadd [#allocation3], 0
      %s18 = smul.addr %s15, 8
      %s19 = scalar_lea.hbm %s0, %s18
      %s20 = sshll.u32 %s19, 4
      %s21 = int_to_ptr.hbm [resolvable:$true] %s20
      %s22 = sshll.u32 [#allocation2], 4
      %s23 = int_to_ptr.vmem [resolvable:$true] %s22
      %28 = dma.hbm_to_vmem [thread:$0]  %s21, 1024, %s23, [#allocation3], 128, 128, 8
    $region5: #{tpu_custom_call.1} parent=1 // pred_fallthru
      _
    // Predicated region
    $region6: #{tpu_custom_call.1} parent=1 // pred_check
      _
    $region7: #{tpu_custom_call.1} parent=1 // pred_check_branch
      %30 = sbr.rel (0) target = $region9
    $region8: #{tpu_custom_call.1} parent=1 // pred_region
      %s31 = sadd.s32 0, 0
      %p32 = scmp.lt.s32.totalorder %s31, 0
      %s33 = scalar_select %p32, %s31, 0
      %s34 = smul.u32 8, %s33
      %36 = vsyncadd [#allocation6], 0
      %s37 = smul.addr %s34, 8
      %s38 = scalar_lea.hbm %s1, %s37
      %s39 = sshll.u32 %s38, 4
      %s40 = int_to_ptr.hbm [resolvable:$true] %s39
      %s41 = sshll.u32 [#allocation5], 4
      %s42 = int_to_ptr.vmem [resolvable:$true] %s41
      %47 = dma.hbm_to_vmem [thread:$0]  %s40, 1024, %s42, [#allocation6], 128, 128, 8
    $region9: #{tpu_custom_call.1} parent=1 // pred_fallthru
      _
    // Predicated region
    $region10: #{tpu_custom_call.1} parent=1 // pred_check
      _
    $region11: #{tpu_custom_call.1} parent=1 // pred_check_branch
      %49 = sbr.rel (0) target = $region13
    $region12: #{tpu_custom_call.1} parent=1 // pred_region
      %51 = dma.done [#allocation3], 1024
    $region13: #{tpu_custom_call.1} parent=1 // pred_fallthru
      _
    // Predicated region
    $region14: #{tpu_custom_call.1} parent=1 // pred_check
      _
    $region15: #{tpu_custom_call.1} parent=1 // pred_check_branch
      %53 = sbr.rel (0) target = $region17
    $region16: #{tpu_custom_call.1} parent=1 // pred_region
      %55 = dma.done [#allocation6], 1024
    $region17: #{tpu_custom_call.1} parent=1 // pred_fallthru
      _
    %s56 = sadd.s32 0, 0
    %p57 = scmp.lt.s32.totalorder %s56, 0
    %s58 = scalar_select %p57, %s56, 0
    %s59 = smul.u32 8, %s58
    %s60 = sadd.s32 0, 0
    %p61 = scmp.lt.s32.totalorder %s60, 0
    %s62 = scalar_select %p61, %s60, 0
    %s63 = smul.u32 8, %s62
    %p64 = scmp.eq.s32.totalorder 0, 0
    // Predicated region
    $region18: #{tpu_custom_call.1} parent=1 // pred_check
      %p65 = pneg %p64
    $region19: #{tpu_custom_call.1} parent=1 // pred_check_branch
      %67 = sbr.rel (%p65) target = $region21
    $region20: #{tpu_custom_call.1} parent=1 // pred_region
      %68 = vst [vmem:[#allocation7] sm:$0xff] 0.0
      %69 = vst [vmem:[#allocation7 + $0x8] sm:$0xff] 0.0
      %70 = vst [vmem:[#allocation7 + $0x10] sm:$0xff] 0.0
    $region21: #{tpu_custom_call.1} parent=1 // pred_fallthru
      _
    %v71 = vld [vmem:[#allocation7] sm:$0xff]
    %v72 = vld [vmem:[#allocation7 + $0x8] sm:$0xff]
    %v73 = vld [vmem:[#allocation7 + $0x10] sm:$0xff]
    %v74 = vld [vmem:[#allocation2] sm:$0xff]
    %v75 = vld [vmem:[#allocation2 + $0x8] sm:$0xff]
    %v76 = vld [vmem:[#allocation2 + $0x10] sm:$0xff]
    %v77 = vld [vmem:[#allocation2 + $0x18] sm:$0xff]
    %v78 = vld [vmem:[#allocation2 + $0x20] sm:$0xff]
    %v79 = vld [vmem:[#allocation2 + $0x28] sm:$0xff]
    %v80 = vld [vmem:[#allocation2 + $0x30] sm:$0xff]
    %v81 = vld [vmem:[#allocation2 + $0x38] sm:$0xff]
    %v82 = vld [vmem:[#allocation5] sm:$0xff]
    %v83 = vld [vmem:[#allocation5 + $0x8] sm:$0xff]
    %v84 = vld [vmem:[#allocation5 + $0x10] sm:$0xff]
    %v85 = vld [vmem:[#allocation5 + $0x18] sm:$0xff]
    %v86 = vld [vmem:[#allocation5 + $0x20] sm:$0xff]
    %v87 = vld [vmem:[#allocation5 + $0x28] sm:$0xff]
    %v88 = vld [vmem:[#allocation5 + $0x30] sm:$0xff]
    %v89 = vld [vmem:[#allocation5 + $0x38] sm:$0xff]
    %vm90 = vcmp.gt.f32.partialorder %v82, 0.0
    %vm91 = vcmp.gt.f32.partialorder %v83, 0.0
    %vm92 = vcmp.gt.f32.partialorder %v84, 0.0
    %vm93 = vcmp.gt.f32.partialorder %v85, 0.0
    %vm94 = vcmp.gt.f32.partialorder %v86, 0.0
    %vm95 = vcmp.gt.f32.partialorder %v87, 0.0
    %vm96 = vcmp.gt.f32.partialorder %v88, 0.0
    %vm97 = vcmp.gt.f32.partialorder %v89, 0.0
    %v98 = vsub.f32 1.0, %v74
    %v99 = vsub.f32 1.0, %v75
    %v100 = vsub.f32 1.0, %v76
    %v101 = vsub.f32 1.0, %v77
    %v102 = vsub.f32 1.0, %v78
    %v103 = vsub.f32 1.0, %v79
    %v104 = vsub.f32 1.0, %v80
    %v105 = vsub.f32 1.0, %v81
    %v106 = vsel %vm90, %v74, %v98
    %v107 = vsel %vm91, %v75, %v99
    %v108 = vsel %vm92, %v76, %v100
    %v109 = vsel %vm93, %v77, %v101
    %v110 = vsel %vm94, %v78, %v102
    %v111 = vsel %vm95, %v79, %v103
    %v112 = vsel %vm96, %v80, %v104
    %v113 = vsel %vm97, %v81, %v105
    %v114 = vlog2.pop %v106
    %v115 = vmul.f32 %v114, 0.6931472
    %v116 = vlog2.pop %v107
    %v117 = vmul.f32 %v116, 0.6931472
    %v118 = vlog2.pop %v108
    %v119 = vmul.f32 %v118, 0.6931472
    %v120 = vlog2.pop %v109
    %v121 = vmul.f32 %v120, 0.6931472
    %v122 = vlog2.pop %v110
    %v123 = vmul.f32 %v122, 0.6931472
    %v124 = vlog2.pop %v111
    %v125 = vmul.f32 %v124, 0.6931472
    %v126 = vlog2.pop %v112
    %v127 = vmul.f32 %v126, 0.6931472
    %v128 = vlog2.pop %v113
    %v129 = vmul.f32 %v128, 0.6931472
    %v130 = vmax.f32 %v115, -100.0
    %v131 = vmax.f32 %v117, -100.0
    %v132 = vmax.f32 %v119, -100.0
    %v133 = vmax.f32 %v121, -100.0
    %v134 = vmax.f32 %v123, -100.0
    %v135 = vmax.f32 %v125, -100.0
    %v136 = vmax.f32 %v127, -100.0
    %v137 = vmax.f32 %v129, -100.0
    %v138 = vsel %vm90, %v74, 0.0
    %v139 = vsel %vm91, %v75, 0.0
    %v140 = vsel %vm92, %v76, 0.0
    %v141 = vsel %vm93, %v77, 0.0
    %v142 = vsel %vm94, %v78, 0.0
    %v143 = vsel %vm95, %v79, 0.0
    %v144 = vsel %vm96, %v80, 0.0
    %v145 = vsel %vm97, %v81, 0.0
    %v146 = vsel %vm90, 1.0, 0.0
    %v147 = vsel %vm91, 1.0, 0.0
    %v148 = vsel %vm92, 1.0, 0.0
    %v149 = vsel %vm93, 1.0, 0.0
    %v150 = vsel %vm94, 1.0, 0.0
    %v151 = vsel %vm95, 1.0, 0.0
    %v152 = vsel %vm96, 1.0, 0.0
    %v153 = vsel %vm97, 1.0, 0.0
    %v154 = vadd.f32 %v74, %v146
    %v155 = vadd.f32 %v75, %v147
    %v156 = vadd.f32 %v76, %v148
    %v157 = vadd.f32 %v77, %v149
    %v158 = vadd.f32 %v78, %v150
    %v159 = vadd.f32 %v79, %v151
    %v160 = vadd.f32 %v80, %v152
    %v161 = vadd.f32 %v81, %v153
    %v162 = vadd.f32 %v138, %v139
    %v163 = vadd.f32 %v162, %v140
    %v164 = vadd.f32 %v163, %v141
    %v165 = vadd.f32 %v164, %v142
    %v166 = vadd.f32 %v165, %v143
    %v167 = vadd.f32 %v166, %v144
    %v168 = vadd.f32 %v167, %v145
    %v169 = vadd.f32 %v168, 0.0
    %v170 = vadd.f32 %v154, %v155
    %v171 = vadd.f32 %v170, %v156
    %v172 = vadd.f32 %v171, %v157
    %v173 = vadd.f32 %v172, %v158
    %v174 = vadd.f32 %v173, %v159
    %v175 = vadd.f32 %v174, %v160
    %v176 = vadd.f32 %v175, %v161
    %v177 = vadd.f32 %v176, 0.0
    %v178 = vadd.f32 %v130, %v131
    %v179 = vadd.f32 %v178, %v132
    %v180 = vadd.f32 %v179, %v133
    %v181 = vadd.f32 %v180, %v134
    %v182 = vadd.f32 %v181, %v135
    %v183 = vadd.f32 %v182, %v136
    %v184 = vadd.f32 %v183, %v137
    %v185 = vadd.f32 %v184, 0.0
    %v186 = vadd.f32 %v71, %v169
    %v187 = vadd.f32 %v72, %v177
    %v188 = vadd.f32 %v73, %v185
    %189 = vst [vmem:[#allocation7] sm:$0xff] %v186
    %190 = vst [vmem:[#allocation7 + $0x8] sm:$0xff] %v187
    %191 = vst [vmem:[#allocation7 + $0x10] sm:$0xff] %v188
    // Predicated region
    $region22: #{tpu_custom_call.1} parent=1 // pred_check
      _
    $region23: #{tpu_custom_call.1} parent=1 // pred_check_branch
      %193 = sbr.rel (0) target = $region25
    $region24: #{tpu_custom_call.1} parent=1 // pred_region
      %195 = vsyncadd [#allocation4], 0
      %s196 = sshll.u32 [#allocation7], 4
      %s197 = int_to_ptr.vmem [resolvable:$true] %s196
      %s198 = sshll.u32 %s2, 4
      %s199 = int_to_ptr.hbm [resolvable:$true] %s198
      %204 = dma.vmem_to_hbm [thread:$0]  %s197, 384, %s199, [#allocation4], 128, 128, 8
    $region25: #{tpu_custom_call.1} parent=1 // pred_fallthru
      _
    // Predicated region
    $region26: #{tpu_custom_call.1} parent=1 // pred_check
      _
    $region27: #{tpu_custom_call.1} parent=1 // pred_check_branch
      %206 = sbr.rel (0) target = $region29
    $region28: #{tpu_custom_call.1} parent=1 // pred_region
      %208 = dma.done [#allocation4], 384
    $region29: #{tpu_custom_call.1} parent=1 // pred_fallthru
      _
    %209 = vsyncpa [#allocation3], 1
    %210 = vsyncpa [#allocation6], 1
    %211 = vsyncpa [#allocation4], 1

</llo_original>
